<compile_context>
chip_gen: v7x
topology: tpu7x:2x2x1
jax: 0.10.0
libtpu: 0.0.40
codegen_flags: <defaults>
</compile_context>

<pallas_src>
import functools

import jax
import jax.numpy as jnp
from jax.experimental import pallas as pl
from jax.experimental.pallas import tpu as pltpu


def _round_up(x, m):
    return ((x + m - 1) // m) * m


def _round_down(x, m):
    return (x // m) * m


def _boosted_ce_kernel(logits_ref, y_ref, loss_ref, *, batch_size):
    """Per-row boosted-CE loss for one batch tile, computed in log space."""
    tb = logits_ref.shape[0]
    x = logits_ref[...].astype(jnp.float32)                     # (tb, C)
    y = y_ref[...]                                              # (tb, 1) int32
    neg_inf = jnp.float32(-jnp.inf)

    # Row statistics (XLU reductions, EUP exp).
    m = jnp.max(x, axis=-1, keepdims=True)                      # (tb, 1)
    e = jnp.exp(x - m)                                          # (tb, C)
    s = jnp.sum(e, axis=-1, keepdims=True)                      # (tb, 1)

    # Correct-class and best-wrong-class logits, masked in logit space so the
    # full-width selects don't depend on the exp output.
    cls = jax.lax.broadcasted_iota(jnp.int32, x.shape, 1)       # (tb, C)
    is_correct = cls == y                                       # (tb, C)
    x_y = jnp.max(jnp.where(is_correct, x, neg_inf), axis=-1, keepdims=True)
    x_alt = jnp.max(jnp.where(is_correct, neg_inf, x), axis=-1, keepdims=True)
    e_alt = jnp.exp(x_alt - m)                                  # (tb, 1)

    # loss = -log(p_correct) - log(1 - p_alt) = 2*log(s) - (x_y - m) - log(s - e_alt)
    log_s = jnp.log(s)
    per_row = 2.0 * log_s - (x_y - m) - jnp.log(s - e_alt)      # (tb, 1)

    # Zero the rows of the ragged last tile (they are also sliced off in the wrapper).
    row = pl.program_id(0) * tb + jax.lax.broadcasted_iota(jnp.int32, (tb, 1), 0)
    per_row = jnp.where(row < batch_size, per_row, 0.0)

    if loss_ref.shape[0] == 1:
        # Lane-dense (1, tb) store: unmasked vst + wide writeback DMA.
        loss_ref[...] = per_row.reshape(1, tb)
    else:
        # Column (tb, 1) fallback for the huge-C / narrow-tile path.
        loss_ref[...] = per_row


def boosted_cross_entropy(output, y):
    """output: (B, C) logits (f32 or bf16 — pass bf16 directly, no caller upcast);
    y: (B,) integer labels.  Returns the scalar f32 mean boosted-CE loss."""
    B, C = output.shape
    itemsize = jnp.dtype(output.dtype).itemsize
    y2d = y.astype(jnp.int32).reshape(B, 1)

    # ---- per-generation VMEM sizing ---------------------------------------
    try:
        vmem_cap = int(getattr(pltpu.get_tpu_info(), "vmem_capacity_bytes", 0)) or (64 << 20)
    except Exception:
        vmem_cap = 64 << 20                    # conservative: v7x per-TensorCore VMEM
    # v7x (64 MiB physical) -> 32 MiB scoped; v5e/v6e (128 MiB) -> 48 MiB scoped.
    vmem_limit = min(vmem_cap // 2, 48 << 20)
    usable = (vmem_limit * 3) // 4             # headroom for out/y buffers & scheduling
    # Per-row working set: 2x double-buffered input rows + ~4 live f32 (tb, C) temps.
    per_row_bytes = 2 * C * itemsize + 4 * C * 4
    rows_fit = usable // per_row_bytes

    # ---- tile-size selection ------------------------------------------------
    lane_dense = rows_fit >= 128
    if lane_dense:
        # Multiple-of-128 tiles -> lane-dense (1, tb) loss blocks.
        tb = min(512, _round_down(rows_fit, 128))      # ~512 rows is the sweet spot
        if B >= 2 * 128:
            # Guarantee >= 2 tiles so both v7x TensorCores get work.
            tb = min(tb, _round_up(pl.cdiv(B, 2), 128))
    else:
        # Huge-C fallback: narrow tiles, column-layout loss output.
        SUB = 16                                        # sublane-safe for f32 and bf16
        if rows_fit < SUB:
            # TODO(synk): split the class axis (second "arbitrary" grid dim with an
            # online max / rescaled-sum reduction) instead of failing for huge C.
            raise NotImplementedError(
                f"numberOfClasses={C} too large for a single-pass tile "
                f"({per_row_bytes} B/row vs {usable} B VMEM budget)")
        tb = _round_down(rows_fit, SUB)
        if B >= 2 * SUB:
            tb = min(tb, _round_up(pl.cdiv(B, 2), SUB))
    if tb >= B:
        tb = B                                          # single full-batch tile (always legal)
    num_tiles = pl.cdiv(B, tb)
    # No jnp.pad of the logits: the ragged last tile is OOB-padded by the pipeline
    # and masked inside the kernel.

    if lane_dense:
        out_shape = jax.ShapeDtypeStruct((1, num_tiles * tb), jnp.float32)
        out_spec = pl.BlockSpec((1, tb), lambda i: (0, i))
    else:
        out_shape = jax.ShapeDtypeStruct((num_tiles * tb, 1), jnp.float32)
        out_spec = pl.BlockSpec((tb, 1), lambda i: (i, 0))

    cost = pl.CostEstimate(
        flops=7 * B * C,
        transcendentals=B * C,
        bytes_accessed=B * C * itemsize + 2 * B * 4,
    )

    per_row = pl.pallas_call(
        functools.partial(_boosted_ce_kernel, batch_size=B),
        out_shape=out_shape,
        grid_spec=pltpu.PrefetchScalarGridSpec(
            num_scalar_prefetch=0,
            grid=(num_tiles,),
            in_specs=[
                pl.BlockSpec((tb, C), lambda i: (i, 0)),
                pl.BlockSpec((tb, 1), lambda i: (i, 0)),
            ],
            out_specs=out_spec,
        ),
        compiler_params=pltpu.CompilerParams(
            dimension_semantics=("parallel",),
            vmem_limit_bytes=vmem_limit,
        ),
        cost_estimate=cost,
    )(output, y2d)

    flat = per_row.reshape(-1)
    return jnp.mean(flat[:B])


def _reference(output, y):
    # Pure-JAX reference mirroring the PyTorch forward.
    p = jax.nn.softmax(output.astype(jnp.float32), axis=1)
    B, C = p.shape
    correct = p[jnp.arange(B), y]
    mask = jnp.arange(C)[None, :] != y[:, None]
    alt = jnp.max(jnp.where(mask, p, -jnp.inf), axis=1)
    return jnp.mean(-jnp.log(correct) - jnp.log(1.0 - alt))


if __name__ == "__main__":
    key = jax.random.PRNGKey(0)
    k1, k2, k3, k4 = jax.random.split(key, 4)

    # Case 1: module-sized small shapes (numberOfClasses=16, batch=8) — single tile.
    logits = jax.random.normal(k1, (8, 16), dtype=jnp.float32)
    labels = jax.random.randint(k2, (8,), 0, 16, dtype=jnp.int32)
    loss = boosted_cross_entropy(logits, labels)
    jax.block_until_ready(loss)
    ref = _reference(logits, labels)
    assert jnp.allclose(loss, ref, rtol=1e-5, atol=1e-5), (loss, ref)

    # Case 2: bf16 logits, ragged multi-tile batch — exercises the lane-dense output,
    # the in-kernel ragged-row mask (no wrapper pad), and the >=2-tile megacore split.
    logits2 = jax.random.normal(k3, (300, 256), dtype=jnp.float32).astype(jnp.bfloat16)
    labels2 = jax.random.randint(k4, (300,), 0, 256, dtype=jnp.int32)
    loss2 = boosted_cross_entropy(logits2, labels2)
    jax.block_until_ready(loss2)
    ref2 = _reference(logits2, labels2)
    assert jnp.allclose(loss2, ref2, rtol=1e-4, atol=1e-4), (loss2, ref2)

    print("KERNEL_OK")
</pallas_src>

<mosaic_0001>
module attributes {stable_mosaic.version = 11 : i64} {
  func.func @_boosted_ce_kernel(%arg0: i32, %arg1: memref<8x16xf32, #tpu.memory_space<vmem>>, %arg2: memref<8x1xi32, #tpu.memory_space<vmem>>, %arg3: memref<1x8xf32, #tpu.memory_space<vmem>>) attributes {dimension_semantics = [#tpu.dimension_semantics<parallel>], iteration_bounds = array<i64: 1>, scalar_prefetch = 0 : i64, scratch_operands = 0 : i64, tpu.core_type = #tpu.core_type<tc>, window_params = [{transform_indices = @transform_0, window_bounds = array<i64: 8, 16>}, {transform_indices = @transform_1, window_bounds = array<i64: 8, 1>}, {transform_indices = @transform_2, window_bounds = array<i64: 1, 8>}]} {
    %c0 = arith.constant 0 : index
    %c0_0 = arith.constant 0 : index
    %0 = vector.load %arg1[%c0, %c0_0] : memref<8x16xf32, #tpu.memory_space<vmem>>, vector<8x16xf32>
    %c0_1 = arith.constant 0 : index
    %c0_2 = arith.constant 0 : index
    %1 = vector.load %arg2[%c0_1, %c0_2] : memref<8x1xi32, #tpu.memory_space<vmem>>, vector<8x1xi32>
    %cst = arith.constant dense<0xFF800000> : vector<8xf32>
    %2 = vector.multi_reduction <maximumf>, %0, %cst [1] : vector<8x16xf32> to vector<8xf32>
    %3 = vector.shape_cast %2 : vector<8xf32> to vector<8x1xf32>
    %4 = vector.broadcast %3 : vector<8x1xf32> to vector<8x16xf32>
    %5 = arith.subf %0, %4 : vector<8x16xf32>
    %6 = math.exp %5 : vector<8x16xf32>
    %cst_3 = arith.constant dense<0.000000e+00> : vector<8xf32>
    %7 = vector.multi_reduction <add>, %6, %cst_3 [1] : vector<8x16xf32> to vector<8xf32>
    %8 = vector.shape_cast %7 : vector<8xf32> to vector<8x1xf32>
    %9 = tpu.iota {dimensions = array<i32: 1>} : vector<8x16xi32>
    %10 = vector.broadcast %1 : vector<8x1xi32> to vector<8x16xi32>
    %11 = arith.cmpi eq, %9, %10 : vector<8x16xi32>
    %cst_4 = arith.constant 0xFF800000 : f32
    %12 = vector.broadcast %cst_4 : f32 to vector<8x16xf32>
    %13 = arith.select %11, %0, %12 : vector<8x16xi1>, vector<8x16xf32>
    %cst_5 = arith.constant dense<0xFF800000> : vector<8xf32>
    %14 = vector.multi_reduction <maximumf>, %13, %cst_5 [1] : vector<8x16xf32> to vector<8xf32>
    %15 = vector.shape_cast %14 : vector<8xf32> to vector<8x1xf32>
    %cst_6 = arith.constant 0xFF800000 : f32
    %16 = vector.broadcast %cst_6 : f32 to vector<8x16xf32>
    %17 = arith.select %11, %16, %0 : vector<8x16xi1>, vector<8x16xf32>
    %cst_7 = arith.constant dense<0xFF800000> : vector<8xf32>
    %18 = vector.multi_reduction <maximumf>, %17, %cst_7 [1] : vector<8x16xf32> to vector<8xf32>
    %19 = vector.shape_cast %18 : vector<8xf32> to vector<8x1xf32>
    %20 = arith.subf %19, %3 : vector<8x1xf32>
    %21 = math.exp %20 : vector<8x1xf32>
    %22 = math.log %8 : vector<8x1xf32>
    %cst_8 = arith.constant 2.000000e+00 : f32
    %23 = vector.broadcast %cst_8 : f32 to vector<8x1xf32>
    %24 = arith.mulf %23, %22 : vector<8x1xf32>
    %25 = arith.subf %15, %3 : vector<8x1xf32>
    %26 = arith.subf %24, %25 : vector<8x1xf32>
    %27 = arith.subf %8, %21 : vector<8x1xf32>
    %28 = math.log %27 : vector<8x1xf32>
    %29 = arith.subf %26, %28 : vector<8x1xf32>
    %c8_i32 = arith.constant 8 : i32
    %30 = arith.muli %arg0, %c8_i32 : i32
    %31 = tpu.iota {dimensions = array<i32: 0>} : vector<8x1xi32>
    %32 = vector.broadcast %30 : i32 to vector<8x1xi32>
    %33 = arith.addi %32, %31 : vector<8x1xi32>
    %c8_i32_9 = arith.constant 8 : i32
    %34 = vector.broadcast %c8_i32_9 : i32 to vector<8x1xi32>
    %35 = arith.cmpi slt, %33, %34 : vector<8x1xi32>
    %cst_10 = arith.constant 0.000000e+00 : f32
    %36 = vector.broadcast %cst_10 : f32 to vector<8x1xf32>
    %37 = arith.select %35, %29, %36 : vector<8x1xi1>, vector<8x1xf32>
    %38 = vector.shape_cast %37 : vector<8x1xf32> to vector<1x8xf32>
    %c0_11 = arith.constant 0 : index
    %c0_12 = arith.constant 0 : index
    %39 = vector.load %arg3[%c0_11, %c0_12] : memref<1x8xf32, #tpu.memory_space<vmem>>, vector<1x8xf32>
    tpu.vector_store %arg3[%c0_11, %c0_12], %38 {strides = array<i32>} : memref<1x8xf32, #tpu.memory_space<vmem>>, vector<1x8xf32>,
    return
  }
  func.func @transform_0(%arg0: i32) -> (i32, i32) {
    %c0_i32 = arith.constant 0 : i32
    %c0_i32_0 = arith.constant 0 : i32
    return %arg0, %c0_i32 : i32, i32
  }
  func.func @transform_1(%arg0: i32) -> (i32, i32) {
    %c0_i32 = arith.constant 0 : i32
    %c0_i32_0 = arith.constant 0 : i32
    return %arg0, %c0_i32 : i32, i32
  }
  func.func @transform_2(%arg0: i32) -> (i32, i32) {
    %c0_i32 = arith.constant 0 : i32
    %c0_i32_0 = arith.constant 0 : i32
    return %c0_i32, %arg0 : i32, i32
  }
}

</mosaic_0001>

<llo_original>
// kernel: tpu_custom_call.1
$region0: #{tpu_custom_call.1}
  #allocation0 [shape = 'u32[]', space=smem, size = 0x4, offset = 0x4, fixed_abs, tag = 'smem constant byte address 0x4 - core index']
  #allocation1 [shape = 'u32[144,128]{1,0:T(1,128)}', space=vmem, size = 0x12000, scoped, tag = 'internal scratch']
  %s0 = inlined_call_operand.vmem [shape: f32[8,16], index: 0, kind: input, shape index: {}]
  %s1 = inlined_call_operand.vmem [shape: s32[8,1], index: 1, kind: input, shape index: {}]
  %s2 = inlined_call_operand.hbm [shape: f32[1,8], index: 2, kind: output, shape index: {}]
  %s3 = sld [smem:[#allocation0]]
  $region18: #{tpu_custom_call.1} parent=0
    _
  %s5 = ssub.s32 1, %s3
  %s6 = scalar_select 0, %s5, %s3
  $region1: #{tpu_custom_call.1} parent=0
    #allocation2 [shape = 'u8[512]{0}', space=vmem, size = 0x400, scoped, tag = 'output window, operand 0, single buffered']
    #allocation3 [shape = 's32[1]{0}', space=sflag, size = 0x4, scoped, tag = 'scoped memory for tpu_custom_call.1']
    %7 = vsyncpa [#allocation3], 0
    // Predicated region
    $region2: #{tpu_custom_call.1} parent=1 // pred_check
      _
    $region3: #{tpu_custom_call.1} parent=1 // pred_check_branch
      %9 = sbr.rel (0) target = $region5
    $region4: #{tpu_custom_call.1} parent=1 // pred_region
      _
    $region5: #{tpu_custom_call.1} parent=1 // pred_fallthru
      _
    // Predicated region
    $region6: #{tpu_custom_call.1} parent=1 // pred_check
      _
    $region7: #{tpu_custom_call.1} parent=1 // pred_check_branch
      %11 = sbr.rel (0) target = $region9
    $region8: #{tpu_custom_call.1} parent=1 // pred_region
      _
    $region9: #{tpu_custom_call.1} parent=1 // pred_fallthru
      _
    %v12 = vld [vmem:[%s0] sm:$0xff]
    %v13 = vld [vmem:[%s1] sm:$0xff]
    %vm14 = vcmask 130048
    %v15 = vsel %vm14, %v12, -inf
    %16 = vmax.xlane.f32.xlu0 %v15
    %v17 = vpop.xlane.xlu0 %16
    %v18 = vsub.f32 %v12, %v17
    %v19 = vmul.f32 %v18, 1.442695
    %v20 = vpow.pop %v19
    %v21 = vsel %vm14, %v20, 0.0
    %22 = vadd.xlane.f32.xlu0 %v21
    %v23 = vpop.xlane.xlu0 %22
    %v24 = vlaneseq
    %v25 = vand.u32 %v24, 127
    %26 = vset.pattern.permute.xlu0 0
    %27 = vperm.xlu0 %26, %v13
    %v28 = vpop.permute.xlu0 %27
    %vm29 = vcmp.eq.s32.totalorder %v25, %v28
    %v30 = vsel %vm29, %v12, -inf
    %v31 = vsel %vm14, %v30, -inf
    %32 = vmax.xlane.f32.xlu0 %v31
    %v33 = vpop.xlane.xlu0 %32
    %v34 = vsel %vm29, -inf, %v12
    %v35 = vsel %vm14, %v34, -inf
    %36 = vmax.xlane.f32.xlu0 %v35
    %v37 = vpop.xlane.xlu0 %36
    %v38 = vsub.f32 %v37, %v17
    %v39 = vmul.f32 %v38, 1.442695
    %v40 = vpow.pop %v39
    %v41 = vlog2.pop %v23
    %v42 = vmul.f32 %v41, 0.6931472
    %v43 = vmul.f32 %v42, 2.0
    %v44 = vsub.f32 %v33, %v17
    %v45 = vsub.f32 %v43, %v44
    %v46 = vsub.f32 %v23, %v40
    %v47 = vlog2.pop %v46
    %v48 = vmul.f32 %v47, 0.6931472
    %v49 = vsub.f32 %v45, %v48
    %s50 = smul.u32 0, 8
    %v51 = vlaneseq
    %v52 = vshrl.u32 %v51, 7
    %v53 = vstv %s50
    %v54 = vadd.s32 %v53, %v52
    %vm55 = vcmp.lt.s32.totalorder %v54, 8
    %v56 = vsel %vm55, %v49, 0.0
    %v58 = vlaneseq
    %v59 = vshrl.u32 %v58, 7
    %v60 = vsub.s32 %v25, %v59
    %v61 = vrot.slane %v56, %v60
    %vm63 = vcmask 57344
    %64 = vst.msk [vmem:[#allocation2] sm:$0x1] %vm63, %v61
    // Predicated region
    $region10: #{tpu_custom_call.1} parent=1 // pred_check
      _
    $region11: #{tpu_custom_call.1} parent=1 // pred_check_branch
      %66 = sbr.rel (0) target = $region13
    $region12: #{tpu_custom_call.1} parent=1 // pred_region
      %s68 = ssub.s32 16, 16
      %69 = vsyncadd [#allocation3], %s68
      %s71 = sshll.u32 [#allocation2], 4
      %s72 = int_to_ptr.vmem [resolvable:$true] %s71
      %74 = dma.vmem_to_hbm [thread:$0]  %s72, 16, %s2, [#allocation3]
    $region13: #{tpu_custom_call.1} parent=1 // pred_fallthru
      _
    // Predicated region
    $region14: #{tpu_custom_call.1} parent=1 // pred_check
      _
    $region15: #{tpu_custom_call.1} parent=1 // pred_check_branch
      %76 = sbr.rel (0) target = $region17
    $region16: #{tpu_custom_call.1} parent=1 // pred_region
      %77 = dma.done [#allocation3], 16
    $region17: #{tpu_custom_call.1} parent=1 // pred_fallthru
      _
    %78 = vsyncpa [#allocation3], 1

</llo_original>
